<compile_context>
chip_gen: v7x
topology: tpu7x:2x2x1
jax: 0.10.0
libtpu: 0.0.40
codegen_flags: <defaults>
</compile_context>

<pallas_src>
import functools

import jax
import jax.numpy as jnp
from jax import lax
from jax.experimental import pallas as pl
from jax.experimental.pallas import tpu as pltpu

_LANE = 128
_SUBLANE = 8
# (4096, 128) f32 tile = 2 MiB; 3 inputs x 2 pipeline buffers = 12 MiB of VMEM.
_MAX_TILE_ROWS = 4096
# Preferred in-kernel streaming chunk (rows) for bounding f32 temporaries.
_PREF_CHUNK_ROWS = 512
# Megacore split: 2 TensorCores on v7x; the extra "parallel" axis is ~free on 1-TC chips.
_N_SPLIT = 2


def _composite_loss_kernel(o_ref, t_ref, m_ref,
                           mse_out, bce_out, msk_out,
                           acc_mse, acc_bce, acc_msk, *,
                           tile_rows, chunk_rows, valid_rows, num_blocks,
                           steps_per_split, mask_tail, padded_grid):
    c = pl.program_id(0)                       # split (parallel) axis
    i = pl.program_id(1)                       # streaming (arbitrary) axis
    blk = c * steps_per_split + i              # raw global block index (unclamped)

    @pl.when(i == 0)
    def _():
        acc_mse[...] = jnp.zeros_like(acc_mse)
        acc_bce[...] = jnp.zeros_like(acc_bce)
        acc_msk[...] = jnp.zeros_like(acc_msk)

    def _fold(x):
        # (chunk_rows, 128) -> (chunk_rows//8, 8, 128) -> (8, 128): pure vreg adds.
        return jnp.sum(x.reshape(-1, _SUBLANE, _LANE), axis=0)

    def _accumulate(masked):
        # Stream the tile in fixed row chunks so only chunk-sized f32 temporaries
        # (not whole-tile ones) are live in VMEM at any point.
        for k in range(tile_rows // chunk_rows):
            r0 = k * chunk_rows
            # Load in native dtype (bf16 halves DMA bytes), upcast to f32 for math.
            o = o_ref[pl.ds(r0, chunk_rows), :].astype(jnp.float32)
            t = t_ref[pl.ds(r0, chunk_rows), :].astype(jnp.float32)
            m = m_ref[pl.ds(r0, chunk_rows), :].astype(jnp.float32)
            if masked:
                # Rows past the end of the (rows_p, 128) slab hold unspecified
                # data (possibly NaN): zero o, t AND m before any math.
                row_ids = lax.broadcasted_iota(jnp.int32, o.shape, 0)
                valid = (blk * tile_rows + r0 + row_ids) < valid_rows
                zero = jnp.zeros_like(o)
                o = jnp.where(valid, o, zero)
                t = jnp.where(valid, t, zero)
                m = jnp.where(valid, m, zero)
            diff = o - t
            mse_el = m * diff * diff
            # numerically stable BCE-with-logits: max(o,0) - o*t + log1p(exp(-|o|))
            bce_el = m * (jnp.maximum(o, 0.0) - o * t
                          + jnp.log1p(jnp.exp(-jnp.abs(o))))
            acc_mse[...] += _fold(mse_el)
            acc_bce[...] += _fold(bce_el)
            acc_msk[...] += _fold(m)

    if mask_tail:
        # Tail-mask VALU work only runs on the single block containing the tail;
        # blocks past num_blocks (grid padding for the 2-way split) are skipped.
        @pl.when(blk < num_blocks - 1)
        def _():
            _accumulate(masked=False)

        @pl.when(blk == num_blocks - 1)
        def _():
            _accumulate(masked=True)
    elif padded_grid:
        @pl.when(blk < num_blocks)
        def _():
            _accumulate(masked=False)
    else:
        _accumulate(masked=False)

    @pl.when(i == pl.num_programs(1) - 1)
    def _():
        # Per-split raw partial sums, kept vreg-shaped (lane-dense output);
        # the tiny cross-lane reduce + division happen in the wrapper.
        mse_out[...] = acc_mse[...]
        bce_out[...] = acc_bce[...]
        msk_out[...] = acc_msk[...]


def composite_loss(outputs, targets, mask, *, w_mse=0.7, w_bce=0.3):
    """Weighted composite of masked MSE + masked BCE-with-logits losses.

    outputs/targets/mask: arrays of identical shape (any float dtype).
    Returns f32[3] = [composite_loss, mse_loss, bce_loss].
    """
    n = int(outputs.size)
    unit = _LANE * _SUBLANE
    n_pad = -(-n // unit) * unit
    rows_p = n_pad // _LANE

    def _as_slab(x):
        xf = x.reshape(-1)
        if n_pad != n:
            # Tiny tail pad (< 1024 elems, zeros -> mask kills it); only hit when
            # numel % 1024 != 0 (atypical for NCHW feature maps).
            xf = jnp.pad(xf, (0, n_pad - n))
        return xf.reshape(rows_p, _LANE)

    o2 = _as_slab(outputs)
    t2 = _as_slab(targets)
    m2 = _as_slab(mask)

    tile_rows = min(_MAX_TILE_ROWS, rows_p)
    if tile_rows % _PREF_CHUNK_ROWS == 0:
        chunk_rows = _PREF_CHUNK_ROWS
    elif tile_rows % 256 == 0:
        chunk_rows = 256
    else:
        chunk_rows = tile_rows          # odd small tiles: single whole-tile chunk

    num_blocks = -(-rows_p // tile_rows)
    n_split = max(1, min(_N_SPLIT, num_blocks))
    steps_per_split = -(-num_blocks // n_split)
    padded_grid = (n_split * steps_per_split) != num_blocks
    mask_tail = (rows_p % tile_rows) != 0

    kernel = functools.partial(
        _composite_loss_kernel,
        tile_rows=tile_rows,
        chunk_rows=chunk_rows,
        valid_rows=rows_p,
        num_blocks=num_blocks,
        steps_per_split=steps_per_split,
        mask_tail=mask_tail,
        padded_grid=padded_grid,
    )

    if padded_grid:
        # Padded (c, i) steps clamp their DMA to the last real block; the kernel
        # skips their accumulation via pl.when(blk < num_blocks).
        def in_map(c, i):
            return (jnp.minimum(c * steps_per_split + i, num_blocks - 1), 0)
    else:
        def in_map(c, i):
            return (c * steps_per_split + i, 0)

    tile_spec = pl.BlockSpec((tile_rows, _LANE), in_map)
    out_spec = pl.BlockSpec((None, _SUBLANE, _LANE), lambda c, i: (c, 0, 0))
    part_shape = jax.ShapeDtypeStruct((n_split, _SUBLANE, _LANE), jnp.float32)

    bytes_accessed = (n * (o2.dtype.itemsize + t2.dtype.itemsize + m2.dtype.itemsize)
                      + 3 * n_split * _SUBLANE * _LANE * 4)
    cost = pl.CostEstimate(
        flops=14 * n,
        transcendentals=2 * n,
        bytes_accessed=bytes_accessed,
    )

    p_mse, p_bce, p_msk = pl.pallas_call(
        kernel,
        out_shape=(part_shape, part_shape, part_shape),
        grid_spec=pltpu.PrefetchScalarGridSpec(
            num_scalar_prefetch=0,
            grid=(n_split, steps_per_split),
            in_specs=[tile_spec, tile_spec, tile_spec],
            out_specs=[out_spec, out_spec, out_spec],
            scratch_shapes=[
                pltpu.VMEM((_SUBLANE, _LANE), jnp.float32),  # mse partials
                pltpu.VMEM((_SUBLANE, _LANE), jnp.float32),  # bce partials
                pltpu.VMEM((_SUBLANE, _LANE), jnp.float32),  # mask partials
            ],
        ),
        compiler_params=pltpu.CompilerParams(
            dimension_semantics=("parallel", "arbitrary"),
            vmem_limit_bytes=32 * 1024 * 1024,
        ),
        cost_estimate=cost,
    )(o2, t2, m2)

    s_mse = jnp.sum(p_mse)
    s_bce = jnp.sum(p_bce)
    s_msk = jnp.sum(p_msk)
    inv = 1.0 / s_msk   # matches reference / PyTorch: unguarded for all-zero mask
    mse = s_mse * inv
    bce = s_bce * inv
    return jnp.stack([w_mse * mse + w_bce * bce, mse, bce]).astype(jnp.float32)


def _reference_loss(outputs, targets, mask, w_mse, w_bce):
    o = outputs.astype(jnp.float32)
    t = targets.astype(jnp.float32)
    m = mask.astype(jnp.float32)
    msum = jnp.sum(m)
    mse = jnp.sum(m * (o - t) ** 2) / msum
    bce_el = jnp.maximum(o, 0.0) - o * t + jnp.log1p(jnp.exp(-jnp.abs(o)))
    bce = jnp.sum(m * bce_el) / msum
    return jnp.stack([w_mse * mse + w_bce * bce, mse, bce])


if __name__ == "__main__":
    key = jax.random.PRNGKey(0)
    k_out, k_tgt, k_msk = jax.random.split(key, 3)
    w_mse, w_bce = 0.7, 0.3  # deterministic weight_dict

    # 1) Small NCHW case (single block, no padding, single split): 2*4*16*16 = 2048.
    N, C, H, W = 2, 4, 16, 16
    outputs = jax.random.normal(k_out, (N, C, H, W), dtype=jnp.float32)
    targets = jax.random.bernoulli(k_tgt, 0.5, (N, C, H, W)).astype(jnp.float32)
    mask = jax.random.bernoulli(k_msk, 0.75, (N, C, H, W)).astype(jnp.float32)
    result = jax.block_until_ready(
        composite_loss(outputs, targets, mask, w_mse=w_mse, w_bce=w_bce))
    expected = _reference_loss(outputs, targets, mask, w_mse, w_bce)
    assert jnp.allclose(result, expected, rtol=1e-5, atol=1e-6), (result, expected)

    # 2) bf16 multi-block case with ragged tail + padded split grid:
    #    9600 rows -> 3 blocks of 4096, grid (2,2), last block tail-masked.
    shape2 = (2, 4, 300, 512)
    o_b = jax.random.normal(k_out, shape2, dtype=jnp.bfloat16)
    t_b = jax.random.bernoulli(k_tgt, 0.5, shape2).astype(jnp.bfloat16)
    m_b = jax.random.bernoulli(k_msk, 0.75, shape2).astype(jnp.bfloat16)
    r2 = jax.block_until_ready(composite_loss(o_b, t_b, m_b, w_mse=w_mse, w_bce=w_bce))
    e2 = _reference_loss(o_b, t_b, m_b, w_mse, w_bce)
    assert jnp.allclose(r2, e2, rtol=5e-3, atol=1e-4), (r2, e2)

    # 3) numel (1536) not a multiple of 1024: minimal wrapper-pad path.
    shape3 = (2, 3, 16, 16)
    o_c = jax.random.normal(k_out, shape3, dtype=jnp.float32)
    t_c = jax.random.bernoulli(k_tgt, 0.5, shape3).astype(jnp.float32)
    m_c = jax.random.bernoulli(k_msk, 0.75, shape3).astype(jnp.float32)
    r3 = jax.block_until_ready(composite_loss(o_c, t_c, m_c, w_mse=w_mse, w_bce=w_bce))
    e3 = _reference_loss(o_c, t_c, m_c, w_mse, w_bce)
    assert jnp.allclose(r3, e3, rtol=1e-5, atol=1e-6), (r3, e3)

    # 4) f32, exactly 2 full blocks -> clean unpadded 2-way split, no tail mask.
    shape4 = (2, 4, 256, 512)
    o_d = jax.random.normal(k_out, shape4, dtype=jnp.float32)
    t_d = jax.random.bernoulli(k_tgt, 0.5, shape4).astype(jnp.float32)
    m_d = jax.random.bernoulli(k_msk, 0.75, shape4).astype(jnp.float32)
    r4 = jax.block_until_ready(composite_loss(o_d, t_d, m_d, w_mse=w_mse, w_bce=w_bce))
    e4 = _reference_loss(o_d, t_d, m_d, w_mse, w_bce)
    assert jnp.allclose(r4, e4, rtol=1e-4, atol=1e-5), (r4, e4)

    print("KERNEL_OK")
</pallas_src>

<mosaic_0001>
module attributes {stable_mosaic.version = 11 : i64} {
  func.func @_composite_loss_kernel(%arg0: i32, %arg1: i32, %arg2: memref<16x128xf32, #tpu.memory_space<vmem>>, %arg3: memref<16x128xf32, #tpu.memory_space<vmem>>, %arg4: memref<16x128xf32, #tpu.memory_space<vmem>>, %arg5: memref<1x8x128xf32, #tpu.memory_space<vmem>>, %arg6: memref<1x8x128xf32, #tpu.memory_space<vmem>>, %arg7: memref<1x8x128xf32, #tpu.memory_space<vmem>>, %arg8: memref<8x128xf32, #tpu.memory_space<vmem>>, %arg9: memref<8x128xf32, #tpu.memory_space<vmem>>, %arg10: memref<8x128xf32, #tpu.memory_space<vmem>>) attributes {dimension_semantics = [#tpu.dimension_semantics<parallel>, #tpu.dimension_semantics<arbitrary>], iteration_bounds = array<i64: 1, 1>, scalar_prefetch = 0 : i64, scratch_operands = 3 : i64, tpu.core_type = #tpu.core_type<tc>, window_params = [{transform_indices = @transform_0, window_bounds = array<i64: 16, 128>}, {transform_indices = @transform_1, window_bounds = array<i64: 16, 128>}, {transform_indices = @transform_2, window_bounds = array<i64: 16, 128>}, {transform_indices = @transform_3, window_bounds = array<i64: 1, 8, 128>}, {transform_indices = @transform_4, window_bounds = array<i64: 1, 8, 128>}, {transform_indices = @transform_5, window_bounds = array<i64: 1, 8, 128>}]} {
    %c0_i32 = arith.constant 0 : i32
    %0 = arith.cmpi eq, %arg1, %c0_i32 : i32
    %1 = arith.extui %0 : i1 to i32
    %c0_i32_0 = arith.constant 0 : i32
    %2 = arith.cmpi ne, %1, %c0_i32_0 : i32
    scf.if %2 {
      %cst_24 = arith.constant 0.000000e+00 : f32
      %38 = vector.broadcast %cst_24 : f32 to vector<8x128xf32>
      %c0_25 = arith.constant 0 : index
      %c0_26 = arith.constant 0 : index
      %39 = vector.load %arg8[%c0_25, %c0_26] : memref<8x128xf32, #tpu.memory_space<vmem>>, vector<8x128xf32>
      tpu.vector_store %arg8[%c0_25, %c0_26], %38 {strides = array<i32>} : memref<8x128xf32, #tpu.memory_space<vmem>>, vector<8x128xf32>,
      %cst_27 = arith.constant 0.000000e+00 : f32
      %40 = vector.broadcast %cst_27 : f32 to vector<8x128xf32>
      %c0_28 = arith.constant 0 : index
      %c0_29 = arith.constant 0 : index
      %41 = vector.load %arg9[%c0_28, %c0_29] : memref<8x128xf32, #tpu.memory_space<vmem>>, vector<8x128xf32>
      tpu.vector_store %arg9[%c0_28, %c0_29], %40 {strides = array<i32>} : memref<8x128xf32, #tpu.memory_space<vmem>>, vector<8x128xf32>,
      %cst_30 = arith.constant 0.000000e+00 : f32
      %42 = vector.broadcast %cst_30 : f32 to vector<8x128xf32>
      %c0_31 = arith.constant 0 : index
      %c0_32 = arith.constant 0 : index
      %43 = vector.load %arg10[%c0_31, %c0_32] : memref<8x128xf32, #tpu.memory_space<vmem>>, vector<8x128xf32>
      tpu.vector_store %arg10[%c0_31, %c0_32], %42 {strides = array<i32>} : memref<8x128xf32, #tpu.memory_space<vmem>>, vector<8x128xf32>,
    } else {
    }
    %c0 = arith.constant 0 : index
    %c0_1 = arith.constant 0 : index
    %3 = vector.load %arg2[%c0, %c0_1] : memref<16x128xf32, #tpu.memory_space<vmem>>, vector<16x128xf32>
    %c0_2 = arith.constant 0 : index
    %c0_3 = arith.constant 0 : index
    %4 = vector.load %arg3[%c0_2, %c0_3] : memref<16x128xf32, #tpu.memory_space<vmem>>, vector<16x128xf32>
    %c0_4 = arith.constant 0 : index
    %c0_5 = arith.constant 0 : index
    %5 = vector.load %arg4[%c0_4, %c0_5] : memref<16x128xf32, #tpu.memory_space<vmem>>, vector<16x128xf32>
    %6 = arith.subf %3, %4 : vector<16x128xf32>
    %7 = arith.mulf %5, %6 : vector<16x128xf32>
    %8 = arith.mulf %7, %6 : vector<16x128xf32>
    %cst = arith.constant 0.000000e+00 : f32
    %9 = vector.broadcast %cst : f32 to vector<16x128xf32>
    %10 = arith.maximumf %3, %9 : vector<16x128xf32>
    %11 = arith.mulf %3, %4 : vector<16x128xf32>
    %12 = arith.subf %10, %11 : vector<16x128xf32>
    %13 = math.absf %3 : vector<16x128xf32>
    %cst_6 = arith.constant 0.000000e+00 : f32
    %14 = vector.broadcast %cst_6 : f32 to vector<16x128xf32>
    %15 = arith.subf %14, %13 : vector<16x128xf32>
    %16 = math.exp %15 : vector<16x128xf32>
    %17 = math.log1p %16 : vector<16x128xf32>
    %18 = arith.addf %12, %17 : vector<16x128xf32>
    %19 = arith.mulf %5, %18 : vector<16x128xf32>
    %c0_7 = arith.constant 0 : index
    %c0_8 = arith.constant 0 : index
    %20 = vector.load %arg8[%c0_7, %c0_8] : memref<8x128xf32, #tpu.memory_space<vmem>>, vector<8x128xf32>
    %21 = vector.shape_cast %8 : vector<16x128xf32> to vector<2x8x128xf32>
    %cst_9 = arith.constant dense<0.000000e+00> : vector<8x128xf32>
    %22 = vector.multi_reduction <add>, %21, %cst_9 [0] : vector<2x8x128xf32> to vector<8x128xf32>
    %23 = arith.addf %20, %22 : vector<8x128xf32>
    %c0_10 = arith.constant 0 : index
    %c0_11 = arith.constant 0 : index
    %24 = vector.load %arg8[%c0_10, %c0_11] : memref<8x128xf32, #tpu.memory_space<vmem>>, vector<8x128xf32>
    tpu.vector_store %arg8[%c0_10, %c0_11], %23 {strides = array<i32>} : memref<8x128xf32, #tpu.memory_space<vmem>>, vector<8x128xf32>,
    %c0_12 = arith.constant 0 : index
    %c0_13 = arith.constant 0 : index
    %25 = vector.load %arg9[%c0_12, %c0_13] : memref<8x128xf32, #tpu.memory_space<vmem>>, vector<8x128xf32>
    %26 = vector.shape_cast %19 : vector<16x128xf32> to vector<2x8x128xf32>
    %cst_14 = arith.constant dense<0.000000e+00> : vector<8x128xf32>
    %27 = vector.multi_reduction <add>, %26, %cst_14 [0] : vector<2x8x128xf32> to vector<8x128xf32>
    %28 = arith.addf %25, %27 : vector<8x128xf32>
    %c0_15 = arith.constant 0 : index
    %c0_16 = arith.constant 0 : index
    %29 = vector.load %arg9[%c0_15, %c0_16] : memref<8x128xf32, #tpu.memory_space<vmem>>, vector<8x128xf32>
    tpu.vector_store %arg9[%c0_15, %c0_16], %28 {strides = array<i32>} : memref<8x128xf32, #tpu.memory_space<vmem>>, vector<8x128xf32>,
    %c0_17 = arith.constant 0 : index
    %c0_18 = arith.constant 0 : index
    %30 = vector.load %arg10[%c0_17, %c0_18] : memref<8x128xf32, #tpu.memory_space<vmem>>, vector<8x128xf32>
    %31 = vector.shape_cast %5 : vector<16x128xf32> to vector<2x8x128xf32>
    %cst_19 = arith.constant dense<0.000000e+00> : vector<8x128xf32>
    %32 = vector.multi_reduction <add>, %31, %cst_19 [0] : vector<2x8x128xf32> to vector<8x128xf32>
    %33 = arith.addf %30, %32 : vector<8x128xf32>
    %c0_20 = arith.constant 0 : index
    %c0_21 = arith.constant 0 : index
    %34 = vector.load %arg10[%c0_20, %c0_21] : memref<8x128xf32, #tpu.memory_space<vmem>>, vector<8x128xf32>
    tpu.vector_store %arg10[%c0_20, %c0_21], %33 {strides = array<i32>} : memref<8x128xf32, #tpu.memory_space<vmem>>, vector<8x128xf32>,
    %c0_i32_22 = arith.constant 0 : i32
    %35 = arith.cmpi eq, %arg1, %c0_i32_22 : i32
    %36 = arith.extui %35 : i1 to i32
    %c0_i32_23 = arith.constant 0 : i32
    %37 = arith.cmpi ne, %36, %c0_i32_23 : i32
    scf.if %37 {
      %c0_24 = arith.constant 0 : index
      %c0_25 = arith.constant 0 : index
      %38 = vector.load %arg8[%c0_24, %c0_25] : memref<8x128xf32, #tpu.memory_space<vmem>>, vector<8x128xf32>
      %c0_26 = arith.constant 0 : index
      %c0_27 = arith.constant 0 : index
      %c0_28 = arith.constant 0 : index
      %39 = vector.load %arg5[%c0_26, %c0_27, %c0_28] : memref<1x8x128xf32, #tpu.memory_space<vmem>>, vector<1x8x128xf32>
      %40 = vector.shape_cast %39 : vector<1x8x128xf32> to vector<8x128xf32>
      %41 = vector.shape_cast %38 : vector<8x128xf32> to vector<1x8x128xf32>
      tpu.vector_store %arg5[%c0_26, %c0_27, %c0_28], %41 {strides = array<i32>} : memref<1x8x128xf32, #tpu.memory_space<vmem>>, vector<1x8x128xf32>,
      %c0_29 = arith.constant 0 : index
      %c0_30 = arith.constant 0 : index
      %42 = vector.load %arg9[%c0_29, %c0_30] : memref<8x128xf32, #tpu.memory_space<vmem>>, vector<8x128xf32>
      %c0_31 = arith.constant 0 : index
      %c0_32 = arith.constant 0 : index
      %c0_33 = arith.constant 0 : index
      %43 = vector.load %arg6[%c0_31, %c0_32, %c0_33] : memref<1x8x128xf32, #tpu.memory_space<vmem>>, vector<1x8x128xf32>
      %44 = vector.shape_cast %43 : vector<1x8x128xf32> to vector<8x128xf32>
      %45 = vector.shape_cast %42 : vector<8x128xf32> to vector<1x8x128xf32>
      tpu.vector_store %arg6[%c0_31, %c0_32, %c0_33], %45 {strides = array<i32>} : memref<1x8x128xf32, #tpu.memory_space<vmem>>, vector<1x8x128xf32>,
      %c0_34 = arith.constant 0 : index
      %c0_35 = arith.constant 0 : index
      %46 = vector.load %arg10[%c0_34, %c0_35] : memref<8x128xf32, #tpu.memory_space<vmem>>, vector<8x128xf32>
      %c0_36 = arith.constant 0 : index
      %c0_37 = arith.constant 0 : index
      %c0_38 = arith.constant 0 : index
      %47 = vector.load %arg7[%c0_36, %c0_37, %c0_38] : memref<1x8x128xf32, #tpu.memory_space<vmem>>, vector<1x8x128xf32>
      %48 = vector.shape_cast %47 : vector<1x8x128xf32> to vector<8x128xf32>
      %49 = vector.shape_cast %46 : vector<8x128xf32> to vector<1x8x128xf32>
      tpu.vector_store %arg7[%c0_36, %c0_37, %c0_38], %49 {strides = array<i32>} : memref<1x8x128xf32, #tpu.memory_space<vmem>>, vector<1x8x128xf32>,
    } else {
    }
    return
  }
  func.func @transform_0(%arg0: i32, %arg1: i32) -> (i32, i32) {
    %c1_i32 = arith.constant 1 : i32
    %0 = arith.muli %arg0, %c1_i32 : i32
    %1 = arith.addi %0, %arg1 : i32
    %c0_i32 = arith.constant 0 : i32
    %c0_i32_0 = arith.constant 0 : i32
    return %1, %c0_i32 : i32, i32
  }
  func.func @transform_1(%arg0: i32, %arg1: i32) -> (i32, i32) {
    %c1_i32 = arith.constant 1 : i32
    %0 = arith.muli %arg0, %c1_i32 : i32
    %1 = arith.addi %0, %arg1 : i32
    %c0_i32 = arith.constant 0 : i32
    %c0_i32_0 = arith.constant 0 : i32
    return %1, %c0_i32 : i32, i32
  }
  func.func @transform_2(%arg0: i32, %arg1: i32) -> (i32, i32) {
    %c1_i32 = arith.constant 1 : i32
    %0 = arith.muli %arg0, %c1_i32 : i32
    %1 = arith.addi %0, %arg1 : i32
    %c0_i32 = arith.constant 0 : i32
    %c0_i32_0 = arith.constant 0 : i32
    return %1, %c0_i32 : i32, i32
  }
  func.func @transform_3(%arg0: i32, %arg1: i32) -> (i32, i32, i32) {
    %c0_i32 = arith.constant 0 : i32
    %c0_i32_0 = arith.constant 0 : i32
    %c0_i32_1 = arith.constant 0 : i32
    return %arg0, %c0_i32, %c0_i32_0 : i32, i32, i32
  }
  func.func @transform_4(%arg0: i32, %arg1: i32) -> (i32, i32, i32) {
    %c0_i32 = arith.constant 0 : i32
    %c0_i32_0 = arith.constant 0 : i32
    %c0_i32_1 = arith.constant 0 : i32
    return %arg0, %c0_i32, %c0_i32_0 : i32, i32, i32
  }
  func.func @transform_5(%arg0: i32, %arg1: i32) -> (i32, i32, i32) {
    %c0_i32 = arith.constant 0 : i32
    %c0_i32_0 = arith.constant 0 : i32
    %c0_i32_1 = arith.constant 0 : i32
    return %arg0, %c0_i32, %c0_i32_0 : i32, i32, i32
  }
}

</mosaic_0001>

<llo_original>
// kernel: tpu_custom_call.1
$region0: #{tpu_custom_call.1}
  #allocation0 [shape = 'u32[]', space=smem, size = 0x4, offset = 0x4, fixed_abs, tag = 'smem constant byte address 0x4 - core index']
  #allocation1 [shape = 'u32[144,128]{1,0:T(1,128)}', space=vmem, size = 0x12000, scoped, tag = 'internal scratch']
  #allocation2 [shape = 'f32[8,128]{1,0:T(8,128)}', space=vmem, size = 0x1000, scoped, tag = 'scratch operand']
  #allocation3 [shape = 'f32[8,128]{1,0:T(8,128)}', space=vmem, size = 0x1000, scoped, tag = 'scratch operand']
  #allocation4 [shape = 'f32[8,128]{1,0:T(8,128)}', space=vmem, size = 0x1000, scoped, tag = 'scratch operand']
  %s0 = inlined_call_operand.hbm [shape: f32[16,128], index: 0, kind: input, shape index: {}]
  %s1 = inlined_call_operand.hbm [shape: f32[16,128], index: 1, kind: input, shape index: {}]
  %s2 = inlined_call_operand.hbm [shape: f32[16,128], index: 2, kind: input, shape index: {}]
  %s3 = inlined_call_operand.hbm [shape: f32[1,8,128], index: 3, kind: output, shape index: {0}]
  %s4 = inlined_call_operand.hbm [shape: f32[1,8,128], index: 4, kind: output, shape index: {1}]
  %s5 = inlined_call_operand.hbm [shape: f32[1,8,128], index: 5, kind: output, shape index: {2}]
  %6 = xla_tuple %s3, %s4, %s5
  %s7 = sld [smem:[#allocation0]]
  $region58: #{tpu_custom_call.1} parent=0
    _
  %s9 = ssub.s32 1, %s7
  %s10 = scalar_select 0, %s9, %s7
  $region1: #{tpu_custom_call.1} parent=0
    #allocation5 [shape = 'u8[8192]{0}', space=vmem, size = 0x2000, scoped, tag = 'input window, operand 0, single buffered']
    #allocation6 [shape = 's32[1]{0}', space=sflag, size = 0x4, scoped, tag = 'scoped memory for tpu_custom_call.1']
    #allocation7 [shape = 's32[1]{0}', space=sflag, size = 0x4, scoped, tag = 'scoped memory for tpu_custom_call.1']
    #allocation8 [shape = 'u8[8192]{0}', space=vmem, size = 0x2000, scoped, tag = 'input window, operand 1, single buffered']
    #allocation9 [shape = 's32[1]{0}', space=sflag, size = 0x4, scoped, tag = 'scoped memory for tpu_custom_call.1']
    #allocation10 [shape = 'u8[8192]{0}', space=vmem, size = 0x2000, scoped, tag = 'input window, operand 2, single buffered']
    #allocation11 [shape = 'u8[4096]{0}', space=vmem, size = 0x1000, scoped, tag = 'output window, operand 0, single buffered']
    #allocation12 [shape = 'u8[4096]{0}', space=vmem, size = 0x1000, scoped, tag = 'output window, operand 1, single buffered']
    #allocation13 [shape = 's32[1]{0}', space=sflag, size = 0x4, scoped, tag = 'scoped memory for tpu_custom_call.1']
    #allocation14 [shape = 'u8[4096]{0}', space=vmem, size = 0x1000, scoped, tag = 'output window, operand 2, single buffered']
    %11 = vsyncpa [#allocation6], 0
    %12 = vsyncpa [#allocation9], 0
    %13 = vsyncpa [#allocation7], 0
    %14 = vsyncpa [#allocation13], 0
    // Predicated region
    $region2: #{tpu_custom_call.1} parent=1 // pred_check
      _
    $region3: #{tpu_custom_call.1} parent=1 // pred_check_branch
      %16 = sbr.rel (0) target = $region5
    $region4: #{tpu_custom_call.1} parent=1 // pred_region
      %s17 = sadd.s32 0, 0
      %s18 = smul.u32 2, %s17
      %s20 = ssub.s32 256, 256
      %21 = vsyncadd [#allocation6], %s20
      %s22 = smul.addr %s18, 128
      %s23 = scalar_lea.hbm %s0, %s22
      %s24 = sshll.u32 [#allocation5], 4
      %s25 = int_to_ptr.vmem [resolvable:$true] %s24
      %30 = dma.hbm_to_vmem [thread:$0]  %s23, 256, %s25, [#allocation6], 128, 128, 8
    $region5: #{tpu_custom_call.1} parent=1 // pred_fallthru
      _
    // Predicated region
    $region6: #{tpu_custom_call.1} parent=1 // pred_check
      _
    $region7: #{tpu_custom_call.1} parent=1 // pred_check_branch
      %32 = sbr.rel (0) target = $region9
    $region8: #{tpu_custom_call.1} parent=1 // pred_region
      %s33 = sadd.s32 0, 0
      %s34 = smul.u32 2, %s33
      %s36 = ssub.s32 256, 256
      %37 = vsyncadd [#allocation9], %s36
      %s38 = smul.addr %s34, 128
      %s39 = scalar_lea.hbm %s1, %s38
      %s40 = sshll.u32 [#allocation8], 4
      %s41 = int_to_ptr.vmem [resolvable:$true] %s40
      %46 = dma.hbm_to_vmem [thread:$0]  %s39, 256, %s41, [#allocation9], 128, 128, 8
    $region9: #{tpu_custom_call.1} parent=1 // pred_fallthru
      _
    // Predicated region
    $region10: #{tpu_custom_call.1} parent=1 // pred_check
      _
    $region11: #{tpu_custom_call.1} parent=1 // pred_check_branch
      %48 = sbr.rel (0) target = $region13
    $region12: #{tpu_custom_call.1} parent=1 // pred_region
      %s49 = sadd.s32 0, 0
      %s50 = smul.u32 2, %s49
      %s52 = ssub.s32 256, 256
      %53 = vsyncadd [#allocation9], %s52
      %s54 = smul.addr %s50, 128
      %s55 = scalar_lea.hbm %s2, %s54
      %s56 = sshll.u32 [#allocation10], 4
      %s57 = int_to_ptr.vmem [resolvable:$true] %s56
      %62 = dma.hbm_to_vmem [thread:$0]  %s55, 256, %s57, [#allocation9], 128, 128, 8
    $region13: #{tpu_custom_call.1} parent=1 // pred_fallthru
      _
    // Predicated region
    $region14: #{tpu_custom_call.1} parent=1 // pred_check
      _
    $region15: #{tpu_custom_call.1} parent=1 // pred_check_branch
      %64 = sbr.rel (0) target = $region17
    $region16: #{tpu_custom_call.1} parent=1 // pred_region
      %65 = dma.done [#allocation6], 256
    $region17: #{tpu_custom_call.1} parent=1 // pred_fallthru
      _
    // Predicated region
    $region18: #{tpu_custom_call.1} parent=1 // pred_check
      _
    $region19: #{tpu_custom_call.1} parent=1 // pred_check_branch
      %67 = sbr.rel (0) target = $region21
    $region20: #{tpu_custom_call.1} parent=1 // pred_region
      %68 = dma.done [#allocation9], 256
    $region21: #{tpu_custom_call.1} parent=1 // pred_fallthru
      _
    // Predicated region
    $region22: #{tpu_custom_call.1} parent=1 // pred_check
      _
    $region23: #{tpu_custom_call.1} parent=1 // pred_check_branch
      %70 = sbr.rel (0) target = $region25
    $region24: #{tpu_custom_call.1} parent=1 // pred_region
      %71 = dma.done [#allocation9], 256
    $region25: #{tpu_custom_call.1} parent=1 // pred_fallthru
      _
    %s72 = sadd.s32 0, 0
    %s73 = smul.u32 2, %s72
    %s74 = sadd.s32 0, 0
    %s75 = smul.u32 2, %s74
    %s76 = sadd.s32 0, 0
    %s77 = smul.u32 2, %s76
    %p78 = scmp.eq.s32.totalorder 0, 0
    // Predicated region
    $region26: #{tpu_custom_call.1} parent=1 // pred_check
      %p79 = pneg %p78
    $region27: #{tpu_custom_call.1} parent=1 // pred_check_branch
      %81 = sbr.rel (%p79) target = $region29
    $region28: #{tpu_custom_call.1} parent=1 // pred_region
      %82 = vst [vmem:[#allocation2] sm:$0xff] 0.0
      %83 = vst [vmem:[#allocation3] sm:$0xff] 0.0
      %84 = vst [vmem:[#allocation4] sm:$0xff] 0.0
    $region29: #{tpu_custom_call.1} parent=1 // pred_fallthru
      _
    %v85 = vld [vmem:[#allocation5] sm:$0xff]
    %v86 = vld [vmem:[#allocation5 + $0x8] sm:$0xff]
    %v87 = vld [vmem:[#allocation8] sm:$0xff]
    %v88 = vld [vmem:[#allocation8 + $0x8] sm:$0xff]
    %v89 = vld [vmem:[#allocation10] sm:$0xff]
    %v90 = vld [vmem:[#allocation10 + $0x8] sm:$0xff]
    %v91 = vsub.f32 %v85, %v87
    %v92 = vsub.f32 %v86, %v88
    %v93 = vmul.f32 %v89, %v91
    %v94 = vmul.f32 %v90, %v92
    %v95 = vmul.f32 %v93, %v91
    %v96 = vmul.f32 %v94, %v92
    %v97 = vmax.f32 %v85, 0.0
    %v98 = vmax.f32 %v86, 0.0
    %v99 = vmul.f32 %v85, %v87
    %v100 = vmul.f32 %v86, %v88
    %v101 = vsub.f32 %v97, %v99
    %v102 = vsub.f32 %v98, %v100
    %v103 = vand.u32 2147483647, %v85
    %v104 = vand.u32 2147483647, %v86
    %v105 = vsub.f32 0.0, %v103
    %v106 = vsub.f32 0.0, %v104
    %v107 = vmul.f32 %v105, 1.442695
    %v108 = vpow.pop %v107
    %v109 = vmul.f32 %v106, 1.442695
    %v110 = vpow.pop %v109
    %v111 = vadd.f32 %v108, 1.0
    %v112 = vlog2.pop %v111
    %v113 = vmul.f32 %v112, 0.6931472
    %v114 = vmul.f32 -0.5, %v108
    %v115 = vadd.f32 %v114, 1.0
    %v116 = vmul.f32 %v115, %v108
    %v117 = vand.u32 2147483647, %v108
    %vm118 = vcmp.lt.f32.partialorder %v117, 0.0004427343
    %v119 = vsel %vm118, %v116, %v113
    %v120 = vadd.f32 %v110, 1.0
    %v121 = vlog2.pop %v120
    %v122 = vmul.f32 %v121, 0.6931472
    %v123 = vmul.f32 -0.5, %v110
    %v124 = vadd.f32 %v123, 1.0
    %v125 = vmul.f32 %v124, %v110
    %v126 = vand.u32 2147483647, %v110
    %vm127 = vcmp.lt.f32.partialorder %v126, 0.0004427343
    %v128 = vsel %vm127, %v125, %v122
    %v129 = vadd.f32 %v101, %v119
    %v130 = vadd.f32 %v102, %v128
    %v131 = vmul.f32 %v89, %v129
    %v132 = vmul.f32 %v90, %v130
    %v133 = vld [vmem:[#allocation2] sm:$0xff]
    %v134 = vadd.f32 %v95, %v96
    %v135 = vadd.f32 %v133, %v134
    %136 = vst [vmem:[#allocation2] sm:$0xff] %v135
    %v137 = vld [vmem:[#allocation3] sm:$0xff]
    %v138 = vadd.f32 %v131, %v132
    %v139 = vadd.f32 %v137, %v138
    %140 = vst [vmem:[#allocation3] sm:$0xff] %v139
    %v141 = vld [vmem:[#allocation4] sm:$0xff]
    %v142 = vadd.f32 %v89, %v90
    %v143 = vadd.f32 %v141, %v142
    %144 = vst [vmem:[#allocation4] sm:$0xff] %v143
    // Predicated region
    $region30: #{tpu_custom_call.1} parent=1 // pred_check
      %p145 = pneg %p78
    $region31: #{tpu_custom_call.1} parent=1 // pred_check_branch
      %147 = sbr.rel (%p145) target = $region33
    $region32: #{tpu_custom_call.1} parent=1 // pred_region
      %v148 = vld [vmem:[#allocation2] sm:$0xff]
      %149 = vst [vmem:[#allocation11] sm:$0xff] %v148
      %v150 = vld [vmem:[#allocation3] sm:$0xff]
      %151 = vst [vmem:[#allocation12] sm:$0xff] %v150
      %v152 = vld [vmem:[#allocation4] sm:$0xff]
      %153 = vst [vmem:[#allocation14] sm:$0xff] %v152
    $region33: #{tpu_custom_call.1} parent=1 // pred_fallthru
      _
    // Predicated region
    $region34: #{tpu_custom_call.1} parent=1 // pred_check
      _
    $region35: #{tpu_custom_call.1} parent=1 // pred_check_branch
      %155 = sbr.rel (0) target = $region37
    $region36: #{tpu_custom_call.1} parent=1 // pred_region
      %s157 = ssub.s32 128, 128
      %158 = vsyncadd [#allocation7], %s157
      %s160 = sshll.u32 [#allocation11], 4
      %s161 = int_to_ptr.vmem [resolvable:$true] %s160
      %163 = dma.vmem_to_hbm [thread:$0]  %s161, 128, %s3, [#allocation7]
    $region37: #{tpu_custom_call.1} parent=1 // pred_fallthru
      _
    // Predicated region
    $region38: #{tpu_custom_call.1} parent=1 // pred_check
      _
    $region39: #{tpu_custom_call.1} parent=1 // pred_check_branch
      %165 = sbr.rel (0) target = $region41
    $region40: #{tpu_custom_call.1} parent=1 // pred_region
      %s167 = ssub.s32 128, 128
      %168 = vsyncadd [#allocation13], %s167
      %s170 = sshll.u32 [#allocation12], 4
      %s171 = int_to_ptr.vmem [resolvable:$true] %s170
      %173 = dma.vmem_to_hbm [thread:$0]  %s171, 128, %s4, [#allocation13]
    $region41: #{tpu_custom_call.1} parent=1 // pred_fallthru
      _
    // Predicated region
    $region42: #{tpu_custom_call.1} parent=1 // pred_check
      _
    $region43: #{tpu_custom_call.1} parent=1 // pred_check_branch
      %175 = sbr.rel (0) target = $region45
    $region44: #{tpu_custom_call.1} parent=1 // pred_region
      %s177 = ssub.s32 128, 128
      %178 = vsyncadd [#allocation13], %s177
      %s180 = sshll.u32 [#allocation14], 4
      %s181 = int_to_ptr.vmem [resolvable:$true] %s180
      %183 = dma.vmem_to_hbm [thread:$0]  %s181, 128, %s5, [#allocation13]
    $region45: #{tpu_custom_call.1} parent=1 // pred_fallthru
      _
    // Predicated region
    $region46: #{tpu_custom_call.1} parent=1 // pred_check
      _
    $region47: #{tpu_custom_call.1} parent=1 // pred_check_branch
      %185 = sbr.rel (0) target = $region49
    $region48: #{tpu_custom_call.1} parent=1 // pred_region
      %186 = dma.done [#allocation7], 128
    $region49: #{tpu_custom_call.1} parent=1 // pred_fallthru
      _
    // Predicated region
    $region50: #{tpu_custom_call.1} parent=1 // pred_check
      _
    $region51: #{tpu_custom_call.1} parent=1 // pred_check_branch
      %188 = sbr.rel (0) target = $region53
    $region52: #{tpu_custom_call.1} parent=1 // pred_region
      %189 = dma.done [#allocation13], 128
    $region53: #{tpu_custom_call.1} parent=1 // pred_fallthru
      _
    // Predicated region
    $region54: #{tpu_custom_call.1} parent=1 // pred_check
      _
    $region55: #{tpu_custom_call.1} parent=1 // pred_check_branch
      %191 = sbr.rel (0) target = $region57
    $region56: #{tpu_custom_call.1} parent=1 // pred_region
      %192 = dma.done [#allocation13], 128
    $region57: #{tpu_custom_call.1} parent=1 // pred_fallthru
      _
    %193 = vsyncpa [#allocation6], 1
    %194 = vsyncpa [#allocation9], 1
    %195 = vsyncpa [#allocation7], 1
    %196 = vsyncpa [#allocation13], 1

</llo_original>
